<compile_context>
chip_gen: v6e
topology: v6e:2x2x1
jax: 0.10.0
libtpu: 0.0.40
codegen_flags: <defaults>
</compile_context>

<pallas_src>
import functools

import jax
import jax.numpy as jnp
from jax.experimental import pallas as pl
from jax.experimental.pallas import tpu as pltpu


# ----------------------------------------------------------------------------
# Pallas kernel: one TB-row tile of the RE head.
#   pooled -> tanh -> cls_fc ; [e1;e2] -> tanh -> e_fc (single fused GEMM)
#   logits = p_h @ Wl[:H] + e1_h @ Wl[H:2H] + e2_h @ Wl[2H:] + bl
# ----------------------------------------------------------------------------
def re_head_kernel(
    pooled_ref,   # VMEM (TB, H)
    e_ref,        # VMEM (2, TB, H)   row-stacked [e1; e2] entity embeddings
    wc_ref,       # VMEM (H, H)       cls_fc weight (in, out)
    bc_ref,       # VMEM (1, H)       cls_fc bias
    we_ref,       # VMEM (H, H)       e_fc weight (in, out)
    be_ref,       # VMEM (1, H)       e_fc bias
    wlp_ref,      # VMEM (H, 2)       label_classifier weight, pooled slice
    wle1_ref,     # VMEM (H, 2)       label_classifier weight, e1 slice
    wle2_ref,     # VMEM (H, 2)       label_classifier weight, e2 slice
    bl_ref,       # VMEM (1, 2)       label_classifier bias
    out_ref,      # VMEM (TB, 2)
    *,
    compute_dtype,
):
    TB, H = pooled_ref.shape

    # FCLayer(use_activation=True): dropout (identity) -> tanh -> linear.
    pooled = jnp.tanh(pooled_ref[...]).astype(compute_dtype)            # (TB, H)
    # Merge the leading (2, TB) dims: e1 rows then e2 rows -> one GEMM LHS.
    e12 = jnp.tanh(e_ref[...].reshape(2 * TB, H)).astype(compute_dtype)  # (2TB, H)

    wc = wc_ref[...].astype(compute_dtype)
    we = we_ref[...].astype(compute_dtype)

    p_h = jnp.dot(pooled, wc, preferred_element_type=jnp.float32) + bc_ref[...]
    e_h = jnp.dot(e12, we, preferred_element_type=jnp.float32) + be_ref[...]
    e1_h = e_h[:TB]     # sublane-aligned static slices (TB is a multiple of 8)
    e2_h = e_h[TB:]

    # FCLayer(use_activation=False): dropout (identity) -> linear, expressed as
    # three GEMM-accumulates instead of a lane-axis concat + one big dot.
    logits = (
        jnp.dot(p_h.astype(compute_dtype), wlp_ref[...].astype(compute_dtype),
                preferred_element_type=jnp.float32)
        + jnp.dot(e1_h.astype(compute_dtype), wle1_ref[...].astype(compute_dtype),
                  preferred_element_type=jnp.float32)
        + jnp.dot(e2_h.astype(compute_dtype), wle2_ref[...].astype(compute_dtype),
                  preferred_element_type=jnp.float32)
        + bl_ref[...]
    )                                                                   # (TB, 2)

    out_ref[...] = logits.astype(out_ref.dtype)


def _round_up(x, m):
    return ((x + m - 1) // m) * m


def re_foodbert_head(sequence_output, pooled_output, input_ids, params,
                     sep1_id, sep2_id, *, row_tile=128,
                     compute_dtype=jnp.float32):
    """Pallas-backed equivalent of ReFoodBERT.forward (post-BERT head).

    sequence_output: [B, S, H] f32
    pooled_output:   [B, H]    f32
    input_ids:       [B, S]    int32
    returns logits:  [B, 2]    f32
    """
    B, S, H = sequence_output.shape

    # Glue (matches torch.nonzero(...)[::2][:, 1] + 1 for rows with exactly two
    # separator occurrences, as the torch module asserts). NOTE: if a separator
    # is missing, argmax silently yields row 1 — the torch assert has no
    # in-kernel equivalent.
    e1_idx = jnp.argmax((input_ids == sep1_id).astype(jnp.int32), axis=1) + 1
    e2_idx = jnp.argmax((input_ids == sep2_id).astype(jnp.int32), axis=1) + 1

    # Gather the two entity rows per batch element OUTSIDE the kernel so only
    # 2*H elements per row ever move, not the whole (S, H) sequence block.
    rows = jnp.arange(B)
    e1 = sequence_output[rows, e1_idx]   # (B, H)
    e2 = sequence_output[rows, e2_idx]   # (B, H)

    # Row tiling: TB rows per grid step (multiple of 8 for f32 sublanes).
    TB = min(int(row_tile), _round_up(B, 8))
    TB = _round_up(TB, 8)
    B_pad = _round_up(B, TB)
    pad = B_pad - B

    pooled = pooled_output
    if pad:
        pooled = jnp.pad(pooled, ((0, pad), (0, 0)))
        e1 = jnp.pad(e1, ((0, pad), (0, 0)))
        e2 = jnp.pad(e2, ((0, pad), (0, 0)))
    e_stacked = jnp.stack([e1, e2], axis=0)          # (2, B_pad, H)

    # Split the (3H, 2) classifier weight so the kernel avoids a lane concat.
    wl = params["lbl_w"]
    wlp, wle1, wle2 = wl[:H], wl[H:2 * H], wl[2 * H:]
    bc2 = params["cls_b"].reshape(1, H)
    be2 = params["e_b"].reshape(1, H)
    bl2 = params["lbl_b"].reshape(1, 2)

    grid = (B_pad // TB,)
    kernel = functools.partial(re_head_kernel, compute_dtype=compute_dtype)

    logits_pad = pl.pallas_call(
        kernel,
        out_shape=jax.ShapeDtypeStruct((B_pad, 2), jnp.float32),
        grid=grid,
        in_specs=[
            pl.BlockSpec((TB, H), lambda i: (i, 0)),        # pooled tile
            pl.BlockSpec((2, TB, H), lambda i: (0, i, 0)),  # [e1; e2] tile
            pl.BlockSpec((H, H), lambda i: (0, 0)),         # cls_fc W
            pl.BlockSpec((1, H), lambda i: (0, 0)),         # cls_fc b
            pl.BlockSpec((H, H), lambda i: (0, 0)),         # e_fc W
            pl.BlockSpec((1, H), lambda i: (0, 0)),         # e_fc b
            pl.BlockSpec((H, 2), lambda i: (0, 0)),         # classifier W (pooled)
            pl.BlockSpec((H, 2), lambda i: (0, 0)),         # classifier W (e1)
            pl.BlockSpec((H, 2), lambda i: (0, 0)),         # classifier W (e2)
            pl.BlockSpec((1, 2), lambda i: (0, 0)),         # classifier b
        ],
        out_specs=pl.BlockSpec((TB, 2), lambda i: (i, 0)),
        compiler_params=pltpu.CompilerParams(
            dimension_semantics=("parallel",)),
    )(pooled, e_stacked,
      params["cls_w"], bc2,
      params["e_w"], be2,
      wlp, wle1, wle2, bl2)

    return logits_pad[:B]


# ----------------------------------------------------------------------------
# Pure-JAX reference for correctness checking.
# ----------------------------------------------------------------------------
def re_foodbert_head_ref(sequence_output, pooled_output, input_ids, params,
                         sep1_id, sep2_id):
    B = sequence_output.shape[0]
    e1_idx = jnp.argmax((input_ids == sep1_id).astype(jnp.int32), axis=1) + 1
    e2_idx = jnp.argmax((input_ids == sep2_id).astype(jnp.int32), axis=1) + 1
    e1 = sequence_output[jnp.arange(B), e1_idx]
    e2 = sequence_output[jnp.arange(B), e2_idx]

    p_h = jnp.tanh(pooled_output) @ params["cls_w"] + params["cls_b"]
    e1_h = jnp.tanh(e1) @ params["e_w"] + params["e_b"]
    e2_h = jnp.tanh(e2) @ params["e_w"] + params["e_b"]
    concat_h = jnp.concatenate([p_h, e1_h, e2_h], axis=-1)
    return concat_h @ params["lbl_w"] + params["lbl_b"]


def init_params(key, hidden_size):
    """Deterministic nn.Linear-style init; weights stored as [in, out]."""
    ks = jax.random.split(key, 6)
    H = hidden_size

    def lin(kw, kb, d_in, d_out):
        bound = 1.0 / jnp.sqrt(d_in)
        w = jax.random.uniform(kw, (d_in, d_out), jnp.float32, -bound, bound)
        b = jax.random.uniform(kb, (d_out,), jnp.float32, -bound, bound)
        return w, b

    cls_w, cls_b = lin(ks[0], ks[1], H, H)       # cls_fc_layer
    e_w, e_b = lin(ks[2], ks[3], H, H)           # e_fc_layer
    lbl_w, lbl_b = lin(ks[4], ks[5], 3 * H, 2)   # label_classifier
    return dict(cls_w=cls_w, cls_b=cls_b, e_w=e_w, e_b=e_b,
                lbl_w=lbl_w, lbl_b=lbl_b)


if __name__ == "__main__":
    B, S, H = 2, 8, 32
    SEP1_ID = 5   # '$'
    SEP2_ID = 6   # '£'

    key = jax.random.PRNGKey(0)
    k_seq, k_pool, k_param = jax.random.split(key, 3)

    # Synthetic BERT outputs (stand-in for self.food_bert(...)).
    sequence_output = jax.random.normal(k_seq, (B, S, H), jnp.float32)
    pooled_output = jax.random.normal(k_pool, (B, H), jnp.float32)

    # input_ids with exactly two '$' and two '£' per row, as the module asserts.
    input_ids = jnp.array(
        [[101, SEP1_ID, 2, SEP1_ID, SEP2_ID, 3, SEP2_ID, 102],
         [101, SEP2_ID, 4, SEP2_ID, SEP1_ID, 7, SEP1_ID, 102]],
        dtype=jnp.int32)

    params = init_params(k_param, H)

    logits = re_foodbert_head(sequence_output, pooled_output, input_ids,
                              params, SEP1_ID, SEP2_ID,
                              row_tile=128, compute_dtype=jnp.float32)
    logits = jax.block_until_ready(logits)

    ref = re_foodbert_head_ref(sequence_output, pooled_output, input_ids,
                               params, SEP1_ID, SEP2_ID)

    assert logits.shape == (B, 2)
    assert jnp.allclose(logits, ref, atol=1e-5, rtol=1e-5), (logits, ref)
    print("KERNEL_OK")
</pallas_src>

<mosaic_0001>
module attributes {stable_mosaic.version = 11 : i64} {
  func.func @re_head_kernel(%arg0: i32, %arg1: memref<8x32xf32, #tpu.memory_space<vmem>>, %arg2: memref<2x8x32xf32, #tpu.memory_space<vmem>>, %arg3: memref<32x32xf32, #tpu.memory_space<vmem>>, %arg4: memref<1x32xf32, #tpu.memory_space<vmem>>, %arg5: memref<32x32xf32, #tpu.memory_space<vmem>>, %arg6: memref<1x32xf32, #tpu.memory_space<vmem>>, %arg7: memref<32x2xf32, #tpu.memory_space<vmem>>, %arg8: memref<32x2xf32, #tpu.memory_space<vmem>>, %arg9: memref<32x2xf32, #tpu.memory_space<vmem>>, %arg10: memref<1x2xf32, #tpu.memory_space<vmem>>, %arg11: memref<8x2xf32, #tpu.memory_space<vmem>>) attributes {dimension_semantics = [#tpu.dimension_semantics<parallel>], iteration_bounds = array<i64: 1>, scalar_prefetch = 0 : i64, scratch_operands = 0 : i64, tpu.core_type = #tpu.core_type<tc>, window_params = [{transform_indices = @transform_0, window_bounds = array<i64: 8, 32>}, {transform_indices = @transform_1, window_bounds = array<i64: 2, 8, 32>}, {pipeline_mode = #tpu.pipeline_mode<synchronous>, transform_indices = @transform_2, window_bounds = array<i64: 32, 32>}, {pipeline_mode = #tpu.pipeline_mode<synchronous>, transform_indices = @transform_3, window_bounds = array<i64: 1, 32>}, {pipeline_mode = #tpu.pipeline_mode<synchronous>, transform_indices = @transform_4, window_bounds = array<i64: 32, 32>}, {pipeline_mode = #tpu.pipeline_mode<synchronous>, transform_indices = @transform_5, window_bounds = array<i64: 1, 32>}, {pipeline_mode = #tpu.pipeline_mode<synchronous>, transform_indices = @transform_6, window_bounds = array<i64: 32, 2>}, {pipeline_mode = #tpu.pipeline_mode<synchronous>, transform_indices = @transform_7, window_bounds = array<i64: 32, 2>}, {pipeline_mode = #tpu.pipeline_mode<synchronous>, transform_indices = @transform_8, window_bounds = array<i64: 32, 2>}, {pipeline_mode = #tpu.pipeline_mode<synchronous>, transform_indices = @transform_9, window_bounds = array<i64: 1, 2>}, {transform_indices = @transform_10, window_bounds = array<i64: 8, 2>}]} {
    %c0 = arith.constant 0 : index
    %c0_0 = arith.constant 0 : index
    %0 = vector.load %arg1[%c0, %c0_0] : memref<8x32xf32, #tpu.memory_space<vmem>>, vector<8x32xf32>
    %1 = math.tanh %0 : vector<8x32xf32>
    %c0_1 = arith.constant 0 : index
    %c0_2 = arith.constant 0 : index
    %c0_3 = arith.constant 0 : index
    %2 = vector.load %arg2[%c0_1, %c0_2, %c0_3] : memref<2x8x32xf32, #tpu.memory_space<vmem>>, vector<2x8x32xf32>
    %3 = vector.shape_cast %2 : vector<2x8x32xf32> to vector<16x32xf32>
    %4 = math.tanh %3 : vector<16x32xf32>
    %c0_4 = arith.constant 0 : index
    %c0_5 = arith.constant 0 : index
    %5 = vector.load %arg3[%c0_4, %c0_5] : memref<32x32xf32, #tpu.memory_space<vmem>>, vector<32x32xf32>
    %c0_6 = arith.constant 0 : index
    %c0_7 = arith.constant 0 : index
    %6 = vector.load %arg5[%c0_6, %c0_7] : memref<32x32xf32, #tpu.memory_space<vmem>>, vector<32x32xf32>
    %cst = arith.constant dense<0.000000e+00> : vector<8x32xf32>
    %7 = tpu.matmul %1, %5, %cst {dimension_numbers = #tpu.dot_dimension_numbers<[1], [0], [0], [1], [0, 0, 1, 1], [], []>} : vector<8x32xf32>, vector<32x32xf32>, vector<8x32xf32> -> vector<8x32xf32>
    %c0_8 = arith.constant 0 : index
    %c0_9 = arith.constant 0 : index
    %8 = vector.load %arg4[%c0_8, %c0_9] : memref<1x32xf32, #tpu.memory_space<vmem>>, vector<1x32xf32>
    %9 = vector.broadcast %8 : vector<1x32xf32> to vector<8x32xf32>
    %10 = arith.addf %7, %9 : vector<8x32xf32>
    %cst_10 = arith.constant dense<0.000000e+00> : vector<16x32xf32>
    %11 = tpu.matmul %4, %6, %cst_10 {dimension_numbers = #tpu.dot_dimension_numbers<[1], [0], [0], [1], [0, 0, 1, 1], [], []>} : vector<16x32xf32>, vector<32x32xf32>, vector<16x32xf32> -> vector<16x32xf32>
    %c0_11 = arith.constant 0 : index
    %c0_12 = arith.constant 0 : index
    %12 = vector.load %arg6[%c0_11, %c0_12] : memref<1x32xf32, #tpu.memory_space<vmem>>, vector<1x32xf32>
    %13 = vector.broadcast %12 : vector<1x32xf32> to vector<16x32xf32>
    %14 = arith.addf %11, %13 : vector<16x32xf32>
    %15 = vector.extract_strided_slice %14 {offsets = [0, 0], sizes = [8, 32], strides = [1, 1]} : vector<16x32xf32> to vector<8x32xf32>
    %16 = vector.extract_strided_slice %14 {offsets = [8, 0], sizes = [8, 32], strides = [1, 1]} : vector<16x32xf32> to vector<8x32xf32>
    %c0_13 = arith.constant 0 : index
    %c0_14 = arith.constant 0 : index
    %17 = vector.load %arg7[%c0_13, %c0_14] : memref<32x2xf32, #tpu.memory_space<vmem>>, vector<32x2xf32>
    %cst_15 = arith.constant dense<0.000000e+00> : vector<8x2xf32>
    %18 = tpu.matmul %10, %17, %cst_15 {dimension_numbers = #tpu.dot_dimension_numbers<[1], [0], [0], [1], [0, 0, 1, 1], [], []>} : vector<8x32xf32>, vector<32x2xf32>, vector<8x2xf32> -> vector<8x2xf32>
    %c0_16 = arith.constant 0 : index
    %c0_17 = arith.constant 0 : index
    %19 = vector.load %arg8[%c0_16, %c0_17] : memref<32x2xf32, #tpu.memory_space<vmem>>, vector<32x2xf32>
    %cst_18 = arith.constant dense<0.000000e+00> : vector<8x2xf32>
    %20 = tpu.matmul %15, %19, %cst_18 {dimension_numbers = #tpu.dot_dimension_numbers<[1], [0], [0], [1], [0, 0, 1, 1], [], []>} : vector<8x32xf32>, vector<32x2xf32>, vector<8x2xf32> -> vector<8x2xf32>
    %21 = arith.addf %18, %20 : vector<8x2xf32>
    %c0_19 = arith.constant 0 : index
    %c0_20 = arith.constant 0 : index
    %22 = vector.load %arg9[%c0_19, %c0_20] : memref<32x2xf32, #tpu.memory_space<vmem>>, vector<32x2xf32>
    %cst_21 = arith.constant dense<0.000000e+00> : vector<8x2xf32>
    %23 = tpu.matmul %16, %22, %cst_21 {dimension_numbers = #tpu.dot_dimension_numbers<[1], [0], [0], [1], [0, 0, 1, 1], [], []>} : vector<8x32xf32>, vector<32x2xf32>, vector<8x2xf32> -> vector<8x2xf32>
    %24 = arith.addf %21, %23 : vector<8x2xf32>
    %c0_22 = arith.constant 0 : index
    %c0_23 = arith.constant 0 : index
    %25 = vector.load %arg10[%c0_22, %c0_23] : memref<1x2xf32, #tpu.memory_space<vmem>>, vector<1x2xf32>
    %26 = vector.broadcast %25 : vector<1x2xf32> to vector<8x2xf32>
    %27 = arith.addf %24, %26 : vector<8x2xf32>
    %c0_24 = arith.constant 0 : index
    %c0_25 = arith.constant 0 : index
    %28 = vector.load %arg11[%c0_24, %c0_25] : memref<8x2xf32, #tpu.memory_space<vmem>>, vector<8x2xf32>
    tpu.vector_store %arg11[%c0_24, %c0_25], %27 {strides = array<i32>} : memref<8x2xf32, #tpu.memory_space<vmem>>, vector<8x2xf32>,
    return
  }
  func.func @transform_0(%arg0: i32) -> (i32, i32) {
    %c0_i32 = arith.constant 0 : i32
    %c0_i32_0 = arith.constant 0 : i32
    return %arg0, %c0_i32 : i32, i32
  }
  func.func @transform_1(%arg0: i32) -> (i32, i32, i32) {
    %c0_i32 = arith.constant 0 : i32
    %c0_i32_0 = arith.constant 0 : i32
    %c0_i32_1 = arith.constant 0 : i32
    return %c0_i32, %arg0, %c0_i32_0 : i32, i32, i32
  }
  func.func @transform_2(%arg0: i32) -> (i32, i32) {
    %c0_i32 = arith.constant 0 : i32
    %c0_i32_0 = arith.constant 0 : i32
    %c0_i32_1 = arith.constant 0 : i32
    return %c0_i32, %c0_i32_0 : i32, i32
  }
  func.func @transform_3(%arg0: i32) -> (i32, i32) {
    %c0_i32 = arith.constant 0 : i32
    %c0_i32_0 = arith.constant 0 : i32
    %c0_i32_1 = arith.constant 0 : i32
    return %c0_i32, %c0_i32_0 : i32, i32
  }
  func.func @transform_4(%arg0: i32) -> (i32, i32) {
    %c0_i32 = arith.constant 0 : i32
    %c0_i32_0 = arith.constant 0 : i32
    %c0_i32_1 = arith.constant 0 : i32
    return %c0_i32, %c0_i32_0 : i32, i32
  }
  func.func @transform_5(%arg0: i32) -> (i32, i32) {
    %c0_i32 = arith.constant 0 : i32
    %c0_i32_0 = arith.constant 0 : i32
    %c0_i32_1 = arith.constant 0 : i32
    return %c0_i32, %c0_i32_0 : i32, i32
  }
  func.func @transform_6(%arg0: i32) -> (i32, i32) {
    %c0_i32 = arith.constant 0 : i32
    %c0_i32_0 = arith.constant 0 : i32
    %c0_i32_1 = arith.constant 0 : i32
    return %c0_i32, %c0_i32_0 : i32, i32
  }
  func.func @transform_7(%arg0: i32) -> (i32, i32) {
    %c0_i32 = arith.constant 0 : i32
    %c0_i32_0 = arith.constant 0 : i32
    %c0_i32_1 = arith.constant 0 : i32
    return %c0_i32, %c0_i32_0 : i32, i32
  }
  func.func @transform_8(%arg0: i32) -> (i32, i32) {
    %c0_i32 = arith.constant 0 : i32
    %c0_i32_0 = arith.constant 0 : i32
    %c0_i32_1 = arith.constant 0 : i32
    return %c0_i32, %c0_i32_0 : i32, i32
  }
  func.func @transform_9(%arg0: i32) -> (i32, i32) {
    %c0_i32 = arith.constant 0 : i32
    %c0_i32_0 = arith.constant 0 : i32
    %c0_i32_1 = arith.constant 0 : i32
    return %c0_i32, %c0_i32_0 : i32, i32
  }
  func.func @transform_10(%arg0: i32) -> (i32, i32) {
    %c0_i32 = arith.constant 0 : i32
    %c0_i32_0 = arith.constant 0 : i32
    return %arg0, %c0_i32 : i32, i32
  }
}

</mosaic_0001>

<llo_original>
// kernel: tpu_custom_call.1
$region0: #{tpu_custom_call.1}
  #allocation0 [shape = 'u32[]', space=smem, size = 0x4, offset = 0x4, fixed_abs, tag = 'smem constant byte address 0x4 - core index']
  #allocation1 [shape = 'u32[144,128]{1,0:T(1,128)}', space=vmem, size = 0x12000, scoped, tag = 'internal scratch']
  %s0 = inlined_call_operand.vmem [shape: f32[8,32], index: 0, kind: input, shape index: {}]
  %s1 = inlined_call_operand.vmem [shape: f32[2,8,32], index: 1, kind: input, shape index: {}]
  %s2 = inlined_call_operand.vmem [shape: f32[32,32], index: 2, kind: input, shape index: {}]
  %s3 = inlined_call_operand.vmem [shape: f32[1,32], index: 3, kind: input, shape index: {}]
  %s4 = inlined_call_operand.vmem [shape: f32[32,32], index: 4, kind: input, shape index: {}]
  %s5 = inlined_call_operand.vmem [shape: f32[1,32], index: 5, kind: input, shape index: {}]
  %s6 = inlined_call_operand.vmem [shape: f32[32,2], index: 6, kind: input, shape index: {}]
  %s7 = inlined_call_operand.vmem [shape: f32[32,2], index: 7, kind: input, shape index: {}]
  %s8 = inlined_call_operand.vmem [shape: f32[32,2], index: 8, kind: input, shape index: {}]
  %s9 = inlined_call_operand.vmem [shape: f32[1,2], index: 9, kind: input, shape index: {}]
  %s10 = inlined_call_operand.vmem [shape: f32[8,2], index: 10, kind: output, shape index: {}]
  %s11 = sld [smem:[#allocation0]]
  $region50: #{tpu_custom_call.1} parent=0
    _
  %s13 = ssub.s32 1, %s11
  %s14 = scalar_select 0, %s13, %s11
  // Predicated region
  $region2: #{tpu_custom_call.1} parent=0 // pred_check
    _
  $region3: #{tpu_custom_call.1} parent=0 // pred_check_branch
    %16 = sbr.rel (0) target = $region5
  $region4: #{tpu_custom_call.1} parent=0 // pred_region
    _
  $region5: #{tpu_custom_call.1} parent=0 // pred_fallthru
    _
  // Predicated region
  $region6: #{tpu_custom_call.1} parent=0 // pred_check
    _
  $region7: #{tpu_custom_call.1} parent=0 // pred_check_branch
    %18 = sbr.rel (0) target = $region9
  $region8: #{tpu_custom_call.1} parent=0 // pred_region
    _
  $region9: #{tpu_custom_call.1} parent=0 // pred_fallthru
    _
  // Predicated region
  $region10: #{tpu_custom_call.1} parent=0 // pred_check
    _
  $region11: #{tpu_custom_call.1} parent=0 // pred_check_branch
    %20 = sbr.rel (0) target = $region13
  $region12: #{tpu_custom_call.1} parent=0 // pred_region
    _
  $region13: #{tpu_custom_call.1} parent=0 // pred_fallthru
    _
  // Predicated region
  $region14: #{tpu_custom_call.1} parent=0 // pred_check
    _
  $region15: #{tpu_custom_call.1} parent=0 // pred_check_branch
    %22 = sbr.rel (0) target = $region17
  $region16: #{tpu_custom_call.1} parent=0 // pred_region
    _
  $region17: #{tpu_custom_call.1} parent=0 // pred_fallthru
    _
  // Predicated region
  $region18: #{tpu_custom_call.1} parent=0 // pred_check
    _
  $region19: #{tpu_custom_call.1} parent=0 // pred_check_branch
    %24 = sbr.rel (0) target = $region21
  $region20: #{tpu_custom_call.1} parent=0 // pred_region
    _
  $region21: #{tpu_custom_call.1} parent=0 // pred_fallthru
    _
  // Predicated region
  $region22: #{tpu_custom_call.1} parent=0 // pred_check
    _
  $region23: #{tpu_custom_call.1} parent=0 // pred_check_branch
    %26 = sbr.rel (0) target = $region25
  $region24: #{tpu_custom_call.1} parent=0 // pred_region
    _
  $region25: #{tpu_custom_call.1} parent=0 // pred_fallthru
    _
  // Predicated region
  $region26: #{tpu_custom_call.1} parent=0 // pred_check
    _
  $region27: #{tpu_custom_call.1} parent=0 // pred_check_branch
    %28 = sbr.rel (0) target = $region29
  $region28: #{tpu_custom_call.1} parent=0 // pred_region
    _
  $region29: #{tpu_custom_call.1} parent=0 // pred_fallthru
    _
  // Predicated region
  $region30: #{tpu_custom_call.1} parent=0 // pred_check
    _
  $region31: #{tpu_custom_call.1} parent=0 // pred_check_branch
    %30 = sbr.rel (0) target = $region33
  $region32: #{tpu_custom_call.1} parent=0 // pred_region
    _
  $region33: #{tpu_custom_call.1} parent=0 // pred_fallthru
    _
  // Predicated region
  $region34: #{tpu_custom_call.1} parent=0 // pred_check
    _
  $region35: #{tpu_custom_call.1} parent=0 // pred_check_branch
    %32 = sbr.rel (0) target = $region37
  $region36: #{tpu_custom_call.1} parent=0 // pred_region
    _
  $region37: #{tpu_custom_call.1} parent=0 // pred_fallthru
    _
  // Predicated region
  $region38: #{tpu_custom_call.1} parent=0 // pred_check
    _
  $region39: #{tpu_custom_call.1} parent=0 // pred_check_branch
    %34 = sbr.rel (0) target = $region41
  $region40: #{tpu_custom_call.1} parent=0 // pred_region
    _
  $region41: #{tpu_custom_call.1} parent=0 // pred_fallthru
    _
  %v35 = vld [vmem:[%s0] sm:$0xff]
  %v36 = vtanh.pop %v35
  %v37 = vld [vmem:[%s1] sm:$0xff]
  %v38 = vld [vmem:[%s1 + $0x8] sm:$0xff]
  %v39 = vtanh.pop %v37
  %v40 = vtanh.pop %v38
  %v41 = vld [vmem:[%s2] sm:$0xff]
  %v42 = vld [vmem:[%s2 + $0x8] sm:$0xff]
  %v43 = vld [vmem:[%s2 + $0x10] sm:$0xff]
  %v44 = vld [vmem:[%s2 + $0x18] sm:$0xff]
  %v45 = vld [vmem:[%s4] sm:$0xff]
  %v46 = vld [vmem:[%s4 + $0x8] sm:$0xff]
  %v47 = vld [vmem:[%s4 + $0x10] sm:$0xff]
  %v48 = vld [vmem:[%s4 + $0x18] sm:$0xff]
  %v49 = vld [vmem:[%s3] sm:$0x1]
  %v51 = vlaneseq
  %v52 = vshrl.u32 %v51, 7
  %v53 = vsub.s32 0, %v52
  %v54 = vrot.slane %v49, %v53
  %vm56 = vcmask 261120
  %v58 = vsel %vm56, %v36, 0
  %60 = vmatprep.subr.mxu0 0.0
  %61 = vmatpush1.msra.mxu0 0.0
  %62 = vmatprep.subr.mxu0 0.0
  %63 = vmatpush1.msra.mxu0 0.0
  %64 = vmatprep.subr.mxu0 0.0
  %65 = vmatpush1.msra.mxu0 0.0
  %66 = vmatprep.subr.mxu0 0.0
  %67 = vmatpush1.msra.mxu0 0.0
  %68 = vmatprep.subr.mxu0 0.0
  %69 = vmatpush1.msra.mxu0 0.0
  %70 = vmatprep.subr.mxu0 0.0
  %71 = vmatpush1.msra.mxu0 0.0
  %72 = vmatprep.subr.mxu0 0.0
  %73 = vmatpush1.msra.mxu0 0.0
  %74 = vmatprep.subr.mxu0 0.0
  %75 = vmatpush1.msra.mxu0 0.0
  %76 = vmatprep.subr.mxu0 0.0
  %77 = vmatpush1.msra.mxu0 0.0
  %78 = vmatprep.subr.mxu0 0.0
  %79 = vmatpush1.msra.mxu0 0.0
  %80 = vmatprep.subr.mxu0 0.0
  %81 = vmatpush1.msra.mxu0 0.0
  %82 = vmatprep.subr.mxu0 0.0
  %83 = vmatpush1.msra.mxu0 0.0
  %84 = vmatprep.subr.mxu0 0.0
  %85 = vmatpush1.msra.mxu0 %v44
  %86 = vmatprep.subr.mxu0 0.0
  %87 = vmatpush1.msra.mxu0 %v43
  %88 = vmatprep.subr.mxu0 0.0
  %89 = vmatpush1.msra.mxu0 %v42
  %90 = vmatprep.subr.mxu0 0.0
  %91 = vmatpush1.msra.mxu0 %v41
  %92 = vmatprep.subr.mxu0 0.0
  %93 = vmatpush2.msra.mxu0 0.0
  %94 = vmatprep.subr.mxu0 0.0
  %95 = vmatpush2.msra.mxu0 0.0
  %96 = vmatprep.subr.mxu0 0.0
  %97 = vmatpush2.msra.mxu0 0.0
  %98 = vmatprep.subr.mxu0 0.0
  %99 = vmatpush2.msra.mxu0 0.0
  %100 = vmatprep.subr.mxu0 0.0
  %101 = vmatpush2.msra.mxu0 0.0
  %102 = vmatprep.subr.mxu0 0.0
  %103 = vmatpush2.msra.mxu0 0.0
  %104 = vmatprep.subr.mxu0 0.0
  %105 = vmatpush2.msra.mxu0 0.0
  %106 = vmatprep.subr.mxu0 0.0
  %107 = vmatpush2.msra.mxu0 0.0
  %108 = vmatprep.subr.mxu0 0.0
  %109 = vmatpush2.msra.mxu0 0.0
  %110 = vmatprep.subr.mxu0 0.0
  %111 = vmatpush2.msra.mxu0 0.0
  %112 = vmatprep.subr.mxu0 0.0
  %113 = vmatpush2.msra.mxu0 0.0
  %114 = vmatprep.subr.mxu0 0.0
  %115 = vmatpush2.msra.mxu0 0.0
  %116 = vmatprep.subr.mxu0 0.0
  %117 = vmatpush2.msra.mxu0 0.0
  %118 = vmatprep.subr.mxu0 0.0
  %119 = vmatpush2.msra.mxu0 0.0
  %120 = vmatprep.subr.mxu0 0.0
  %121 = vmatpush2.msra.mxu0 0.0
  %122 = vmatprep.subr.mxu0 0.0
  %123 = vmatpush2.msra.mxu0 0.0
  %124 = vmatprep.mubr.f32.mxu0 0.0
  %125 = vmatmul.mubr.f32.gmra.mxu0 %v58
  %v126 = vpop.f32.mrf.mxu0
  %v127 = vadd.f32 %v54, %v126
  %v128 = vpop.f32.mrf.mxu0
  %129 = vdwg.mxu0
  %v130 = vld [vmem:[%s5] sm:$0x1]
  %v132 = vlaneseq
  %v133 = vshrl.u32 %v132, 7
  %v134 = vsub.s32 0, %v133
  %v135 = vrot.slane %v130, %v134
  %v138 = vsel %vm56, %v39, 0
  %v141 = vsel %vm56, %v40, 0
  %143 = vmatprep.subr.mxu0 0.0
  %144 = vmatpush1.msra.mxu0 0.0
  %145 = vmatprep.subr.mxu0 0.0
  %146 = vmatpush1.msra.mxu0 0.0
  %147 = vmatprep.subr.mxu0 0.0
  %148 = vmatpush1.msra.mxu0 0.0
  %149 = vmatprep.subr.mxu0 0.0
  %150 = vmatpush1.msra.mxu0 0.0
  %151 = vmatprep.subr.mxu0 0.0
  %152 = vmatpush1.msra.mxu0 0.0
  %153 = vmatprep.subr.mxu0 0.0
  %154 = vmatpush1.msra.mxu0 0.0
  %155 = vmatprep.subr.mxu0 0.0
  %156 = vmatpush1.msra.mxu0 0.0
  %157 = vmatprep.subr.mxu0 0.0
  %158 = vmatpush1.msra.mxu0 0.0
  %159 = vmatprep.subr.mxu0 0.0
  %160 = vmatpush1.msra.mxu0 0.0
  %161 = vmatprep.subr.mxu0 0.0
  %162 = vmatpush1.msra.mxu0 0.0
  %163 = vmatprep.subr.mxu0 0.0
  %164 = vmatpush1.msra.mxu0 0.0
  %165 = vmatprep.subr.mxu0 0.0
  %166 = vmatpush1.msra.mxu0 0.0
  %167 = vmatprep.subr.mxu0 0.0
  %168 = vmatpush1.msra.mxu0 %v48
  %169 = vmatprep.subr.mxu0 0.0
  %170 = vmatpush1.msra.mxu0 %v47
  %171 = vmatprep.subr.mxu0 0.0
  %172 = vmatpush1.msra.mxu0 %v46
  %173 = vmatprep.subr.mxu0 0.0
  %174 = vmatpush1.msra.mxu0 %v45
  %175 = vmatprep.subr.mxu0 0.0
  %176 = vmatpush2.msra.mxu0 0.0
  %177 = vmatprep.subr.mxu0 0.0
  %178 = vmatpush2.msra.mxu0 0.0
  %179 = vmatprep.subr.mxu0 0.0
  %180 = vmatpush2.msra.mxu0 0.0
  %181 = vmatprep.subr.mxu0 0.0
  %182 = vmatpush2.msra.mxu0 0.0
  %183 = vmatprep.subr.mxu0 0.0
  %184 = vmatpush2.msra.mxu0 0.0
  %185 = vmatprep.subr.mxu0 0.0
  %186 = vmatpush2.msra.mxu0 0.0
  %187 = vmatprep.subr.mxu0 0.0
  %188 = vmatpush2.msra.mxu0 0.0
  %189 = vmatprep.subr.mxu0 0.0
  %190 = vmatpush2.msra.mxu0 0.0
  %191 = vmatprep.subr.mxu0 0.0
  %192 = vmatpush2.msra.mxu0 0.0
  %193 = vmatprep.subr.mxu0 0.0
  %194 = vmatpush2.msra.mxu0 0.0
  %195 = vmatprep.subr.mxu0 0.0
  %196 = vmatpush2.msra.mxu0 0.0
  %197 = vmatprep.subr.mxu0 0.0
  %198 = vmatpush2.msra.mxu0 0.0
  %199 = vmatprep.subr.mxu0 0.0
  %200 = vmatpush2.msra.mxu0 0.0
  %201 = vmatprep.subr.mxu0 0.0
  %202 = vmatpush2.msra.mxu0 0.0
  %203 = vmatprep.subr.mxu0 0.0
  %204 = vmatpush2.msra.mxu0 0.0
  %205 = vmatprep.subr.mxu0 0.0
  %206 = vmatpush2.msra.mxu0 0.0
  %207 = vmatprep.mubr.f32.mxu0 0.0
  %208 = vmatmul.mubr.f32.gmra.mxu0 %v138
  %v209 = vpop.f32.mrf.mxu0
  %v210 = vadd.f32 %v135, %v209
  %v211 = vpop.f32.mrf.mxu0
  %212 = vmatprep.mubr.f32.mxu0 0.0
  %213 = vmatmul.mubr.f32.gmra.mxu0 %v141
  %v214 = vpop.f32.mrf.mxu0
  %v215 = vadd.f32 %v135, %v214
  %v216 = vpop.f32.mrf.mxu0
  %217 = vdwg.mxu0
  %v218 = vld [vmem:[%s6] sm:$0xff]
  %v219 = vld [vmem:[%s6 + $0x8] sm:$0xff]
  %v220 = vld [vmem:[%s6 + $0x10] sm:$0xff]
  %v221 = vld [vmem:[%s6 + $0x18] sm:$0xff]
  %v222 = vld [vmem:[%s7] sm:$0xff]
  %v223 = vld [vmem:[%s7 + $0x8] sm:$0xff]
  %v224 = vld [vmem:[%s7 + $0x10] sm:$0xff]
  %v225 = vld [vmem:[%s7 + $0x18] sm:$0xff]
  %v227 = vsel %vm56, %v210, 0
  %229 = vmatprep.subr.mxu0 0.0
  %230 = vmatpush1.msra.mxu0 0.0
  %231 = vmatprep.subr.mxu0 0.0
  %232 = vmatpush1.msra.mxu0 0.0
  %233 = vmatprep.subr.mxu0 0.0
  %234 = vmatpush1.msra.mxu0 0.0
  %235 = vmatprep.subr.mxu0 0.0
  %236 = vmatpush1.msra.mxu0 0.0
  %237 = vmatprep.subr.mxu0 0.0
  %238 = vmatpush1.msra.mxu0 0.0
  %239 = vmatprep.subr.mxu0 0.0
  %240 = vmatpush1.msra.mxu0 0.0
  %241 = vmatprep.subr.mxu0 0.0
  %242 = vmatpush1.msra.mxu0 0.0
  %243 = vmatprep.subr.mxu0 0.0
  %244 = vmatpush1.msra.mxu0 0.0
  %245 = vmatprep.subr.mxu0 0.0
  %246 = vmatpush1.msra.mxu0 0.0
  %247 = vmatprep.subr.mxu0 0.0
  %248 = vmatpush1.msra.mxu0 0.0
  %249 = vmatprep.subr.mxu0 0.0
  %250 = vmatpush1.msra.mxu0 0.0
  %251 = vmatprep.subr.mxu0 0.0
  %252 = vmatpush1.msra.mxu0 0.0
  %253 = vmatprep.subr.mxu0 0.0
  %254 = vmatpush1.msra.mxu0 %v225
  %255 = vmatprep.subr.mxu0 0.0
  %256 = vmatpush1.msra.mxu0 %v224
  %257 = vmatprep.subr.mxu0 0.0
  %258 = vmatpush1.msra.mxu0 %v223
  %259 = vmatprep.subr.mxu0 0.0
  %260 = vmatpush1.msra.mxu0 %v222
  %261 = vmatprep.subr.mxu0 0.0
  %262 = vmatpush2.msra.mxu0 0.0
  %263 = vmatprep.subr.mxu0 0.0
  %264 = vmatpush2.msra.mxu0 0.0
  %265 = vmatprep.subr.mxu0 0.0
  %266 = vmatpush2.msra.mxu0 0.0
  %267 = vmatprep.subr.mxu0 0.0
  %268 = vmatpush2.msra.mxu0 0.0
  %269 = vmatprep.subr.mxu0 0.0
  %270 = vmatpush2.msra.mxu0 0.0
  %271 = vmatprep.subr.mxu0 0.0
  %272 = vmatpush2.msra.mxu0 0.0
  %273 = vmatprep.subr.mxu0 0.0
  %274 = vmatpush2.msra.mxu0 0.0
  %275 = vmatprep.subr.mxu0 0.0
  %276 = vmatpush2.msra.mxu0 0.0
  %277 = vmatprep.subr.mxu0 0.0
  %278 = vmatpush2.msra.mxu0 0.0
  %279 = vmatprep.subr.mxu0 0.0
  %280 = vmatpush2.msra.mxu0 0.0
  %281 = vmatprep.subr.mxu0 0.0
  %282 = vmatpush2.msra.mxu0 0.0
  %283 = vmatprep.subr.mxu0 0.0
  %284 = vmatpush2.msra.mxu0 0.0
  %285 = vmatprep.subr.mxu0 0.0
  %286 = vmatpush2.msra.mxu0 0.0
  %287 = vmatprep.subr.mxu0 0.0
  %288 = vmatpush2.msra.mxu0 0.0
  %289 = vmatprep.subr.mxu0 0.0
  %290 = vmatpush2.msra.mxu0 0.0
  %291 = vmatprep.subr.mxu0 0.0
  %292 = vmatpush2.msra.mxu0 0.0
  %293 = vmatprep.mubr.f32.mxu0 0.0
  %294 = vmatmul.mubr.f32.gmra.mxu0 %v227
  %v295 = vpop.f32.mrf.mxu0
  %v296 = vadd.f32 0.0, %v295
  %v297 = vpop.f32.mrf.mxu0
  %298 = vdwg.mxu0
  %v300 = vsel %vm56, %v127, 0
  %302 = vmatprep.subr.mxu0 0.0
  %303 = vmatpush1.msra.mxu0 0.0
  %304 = vmatprep.subr.mxu0 0.0
  %305 = vmatpush1.msra.mxu0 0.0
  %306 = vmatprep.subr.mxu0 0.0
  %307 = vmatpush1.msra.mxu0 0.0
  %308 = vmatprep.subr.mxu0 0.0
  %309 = vmatpush1.msra.mxu0 0.0
  %310 = vmatprep.subr.mxu0 0.0
  %311 = vmatpush1.msra.mxu0 0.0
  %312 = vmatprep.subr.mxu0 0.0
  %313 = vmatpush1.msra.mxu0 0.0
  %314 = vmatprep.subr.mxu0 0.0
  %315 = vmatpush1.msra.mxu0 0.0
  %316 = vmatprep.subr.mxu0 0.0
  %317 = vmatpush1.msra.mxu0 0.0
  %318 = vmatprep.subr.mxu0 0.0
  %319 = vmatpush1.msra.mxu0 0.0
  %320 = vmatprep.subr.mxu0 0.0
  %321 = vmatpush1.msra.mxu0 0.0
  %322 = vmatprep.subr.mxu0 0.0
  %323 = vmatpush1.msra.mxu0 0.0
  %324 = vmatprep.subr.mxu0 0.0
  %325 = vmatpush1.msra.mxu0 0.0
  %326 = vmatprep.subr.mxu0 0.0
  %327 = vmatpush1.msra.mxu0 %v221
  %328 = vmatprep.subr.mxu0 0.0
  %329 = vmatpush1.msra.mxu0 %v220
  %330 = vmatprep.subr.mxu0 0.0
  %331 = vmatpush1.msra.mxu0 %v219
  %332 = vmatprep.subr.mxu0 0.0
  %333 = vmatpush1.msra.mxu0 %v218
  %334 = vmatprep.subr.mxu0 0.0
  %335 = vmatpush2.msra.mxu0 0.0
  %336 = vmatprep.subr.mxu0 0.0
  %337 = vmatpush2.msra.mxu0 0.0
  %338 = vmatprep.subr.mxu0 0.0
  %339 = vmatpush2.msra.mxu0 0.0
  %340 = vmatprep.subr.mxu0 0.0
  %341 = vmatpush2.msra.mxu0 0.0
  %342 = vmatprep.subr.mxu0 0.0
  %343 = vmatpush2.msra.mxu0 0.0
  %344 = vmatprep.subr.mxu0 0.0
  %345 = vmatpush2.msra.mxu0 0.0
  %346 = vmatprep.subr.mxu0 0.0
  %347 = vmatpush2.msra.mxu0 0.0
  %348 = vmatprep.subr.mxu0 0.0
  %349 = vmatpush2.msra.mxu0 0.0
  %350 = vmatprep.subr.mxu0 0.0
  %351 = vmatpush2.msra.mxu0 0.0
  %352 = vmatprep.subr.mxu0 0.0
  %353 = vmatpush2.msra.mxu0 0.0
  %354 = vmatprep.subr.mxu0 0.0
  %355 = vmatpush2.msra.mxu0 0.0
  %356 = vmatprep.subr.mxu0 0.0
  %357 = vmatpush2.msra.mxu0 0.0
  %358 = vmatprep.subr.mxu0 0.0
  %359 = vmatpush2.msra.mxu0 0.0
  %360 = vmatprep.subr.mxu0 0.0
  %361 = vmatpush2.msra.mxu0 0.0
  %362 = vmatprep.subr.mxu0 0.0
  %363 = vmatpush2.msra.mxu0 0.0
  %364 = vmatprep.subr.mxu0 0.0
  %365 = vmatpush2.msra.mxu0 0.0
  %366 = vmatprep.mubr.f32.mxu0 0.0
  %367 = vmatmul.mubr.f32.gmra.mxu0 %v300
  %v368 = vpop.f32.mrf.mxu0
  %v369 = vadd.f32 %v296, %v368
  %v370 = vpop.f32.mrf.mxu0
  %371 = vdwg.mxu0
  %v372 = vld [vmem:[%s8] sm:$0xff]
  %v373 = vld [vmem:[%s8 + $0x8] sm:$0xff]
  %v374 = vld [vmem:[%s8 + $0x10] sm:$0xff]
  %v375 = vld [vmem:[%s8 + $0x18] sm:$0xff]
  %v377 = vsel %vm56, %v215, 0
  %379 = vmatprep.subr.mxu0 0.0
  %380 = vmatpush1.msra.mxu0 0.0
  %381 = vmatprep.subr.mxu0 0.0
  %382 = vmatpush1.msra.mxu0 0.0
  %383 = vmatprep.subr.mxu0 0.0
  %384 = vmatpush1.msra.mxu0 0.0
  %385 = vmatprep.subr.mxu0 0.0
  %386 = vmatpush1.msra.mxu0 0.0
  %387 = vmatprep.subr.mxu0 0.0
  %388 = vmatpush1.msra.mxu0 0.0
  %389 = vmatprep.subr.mxu0 0.0
  %390 = vmatpush1.msra.mxu0 0.0
  %391 = vmatprep.subr.mxu0 0.0
  %392 = vmatpush1.msra.mxu0 0.0
  %393 = vmatprep.subr.mxu0 0.0
  %394 = vmatpush1.msra.mxu0 0.0
  %395 = vmatprep.subr.mxu0 0.0
  %396 = vmatpush1.msra.mxu0 0.0
  %397 = vmatprep.subr.mxu0 0.0
  %398 = vmatpush1.msra.mxu0 0.0
  %399 = vmatprep.subr.mxu0 0.0
  %400 = vmatpush1.msra.mxu0 0.0
  %401 = vmatprep.subr.mxu0 0.0
  %402 = vmatpush1.msra.mxu0 0.0
  %403 = vmatprep.subr.mxu0 0.0
  %404 = vmatpush1.msra.mxu0 %v375
  %405 = vmatprep.subr.mxu0 0.0
  %406 = vmatpush1.msra.mxu0 %v374
  %407 = vmatprep.subr.mxu0 0.0
  %408 = vmatpush1.msra.mxu0 %v373
  %409 = vmatprep.subr.mxu0 0.0
  %410 = vmatpush1.msra.mxu0 %v372
  %411 = vmatprep.subr.mxu0 0.0
  %412 = vmatpush2.msra.mxu0 0.0
  %413 = vmatprep.subr.mxu0 0.0
  %414 = vmatpush2.msra.mxu0 0.0
  %415 = vmatprep.subr.mxu0 0.0
  %416 = vmatpush2.msra.mxu0 0.0
  %417 = vmatprep.subr.mxu0 0.0
  %418 = vmatpush2.msra.mxu0 0.0
  %419 = vmatprep.subr.mxu0 0.0
  %420 = vmatpush2.msra.mxu0 0.0
  %421 = vmatprep.subr.mxu0 0.0
  %422 = vmatpush2.msra.mxu0 0.0
  %423 = vmatprep.subr.mxu0 0.0
  %424 = vmatpush2.msra.mxu0 0.0
  %425 = vmatprep.subr.mxu0 0.0
  %426 = vmatpush2.msra.mxu0 0.0
  %427 = vmatprep.subr.mxu0 0.0
  %428 = vmatpush2.msra.mxu0 0.0
  %429 = vmatprep.subr.mxu0 0.0
  %430 = vmatpush2.msra.mxu0 0.0
  %431 = vmatprep.subr.mxu0 0.0
  %432 = vmatpush2.msra.mxu0 0.0
  %433 = vmatprep.subr.mxu0 0.0
  %434 = vmatpush2.msra.mxu0 0.0
  %435 = vmatprep.subr.mxu0 0.0
  %436 = vmatpush2.msra.mxu0 0.0
  %437 = vmatprep.subr.mxu0 0.0
  %438 = vmatpush2.msra.mxu0 0.0
  %439 = vmatprep.subr.mxu0 0.0
  %440 = vmatpush2.msra.mxu0 0.0
  %441 = vmatprep.subr.mxu0 0.0
  %442 = vmatpush2.msra.mxu0 0.0
  %443 = vmatprep.mubr.f32.mxu0 0.0
  %444 = vmatmul.mubr.f32.gmra.mxu0 %v377
  %v445 = vpop.f32.mrf.mxu0
  %v446 = vadd.f32 0.0, %v445
  %v447 = vpop.f32.mrf.mxu0
  %448 = vdwg.mxu0
  %v449 = vadd.f32 %v369, %v446
  %v450 = vld [vmem:[%s9] sm:$0x1]
  %v452 = vlaneseq
  %v453 = vshrl.u32 %v452, 7
  %v454 = vsub.s32 0, %v453
  %v455 = vrot.slane %v450, %v454
  %v457 = vadd.f32 %v449, %v455
  %vm458 = vcmask 15360
  %459 = vst.msk [vmem:[%s10] sm:$0xff] %vm458, %v457
  // Predicated region
  $region42: #{tpu_custom_call.1} parent=0 // pred_check
    _
  $region43: #{tpu_custom_call.1} parent=0 // pred_check_branch
    %461 = sbr.rel (0) target = $region45
  $region44: #{tpu_custom_call.1} parent=0 // pred_region
    _
  $region45: #{tpu_custom_call.1} parent=0 // pred_fallthru
    _
  // Predicated region
  $region46: #{tpu_custom_call.1} parent=0 // pred_check
    _
  $region47: #{tpu_custom_call.1} parent=0 // pred_check_branch
    %463 = sbr.rel (0) target = $region49
  $region48: #{tpu_custom_call.1} parent=0 // pred_region
    _
  $region49: #{tpu_custom_call.1} parent=0 // pred_fallthru
    _

</llo_original>
